<compile_context>
chip_gen: v6e
topology: v6e:2x2x1
jax: 0.10.0
libtpu: 0.0.40
codegen_flags: <defaults>
</compile_context>

<pallas_src>
import math
import numpy as np

import jax
import jax.numpy as jnp
from jax.experimental import pallas as pl
from jax.experimental.pallas import tpu as pltpu


# ----------------------------- Pallas kernel ------------------------------ #

def _fused_patch_embed_kernel(w_ref, xp_ref, b_ref, o_ref, acc_ref):
    # grid = (n_tiles, k_tiles); n is "parallel", k (reduction) is innermost
    # "arbitrary".  o_ref block index is constant across k -> resident
    # accumulator pattern with init/finalize via pl.when.
    k = pl.program_id(1)

    @pl.when(k == 0)
    def _init():
        acc_ref[...] = jnp.zeros_like(acc_ref)

    # bf16 x bf16 -> f32 accumulate on the MXU.
    acc_ref[...] += jnp.dot(w_ref[...], xp_ref[...],
                            preferred_element_type=jnp.float32)

    @pl.when(k == pl.num_programs(1) - 1)
    def _finalize():
        # bias is (E, 1) -> lane-broadcast against (E, tn); output store is
        # lane-dense (last dim = tn, a multiple of 128).
        o_ref[...] = acc_ref[...] + b_ref[...]


def _round_up(x, m):
    return ((x + m - 1) // m) * m


def _fused_embed_matmul(w, xp, bias, *, tn_target=256, tk_target=512):
    """out[e, n] = sum_k w[e, k] * xp[k, n] + bias[e]  — one Pallas call.

    N (= B * num_tokens) sits on the lane axis of the output; E (=embed_dim,
    small) rides the sublanes.  K is tiled and accumulated in a f32 VMEM
    scratch.
    """
    E, K = w.shape
    K2, N = xp.shape
    assert K == K2

    if N <= tn_target:
        n_p = _round_up(max(N, 1), 128)
        tn = n_p
    else:
        n_p = _round_up(N, tn_target)
        tn = tn_target
    if K <= tk_target:
        k_p = _round_up(max(K, 1), 128)
        tk = k_p
    else:
        k_p = _round_up(K, tk_target)
        tk = tk_target

    # jnp.pad (no zeros().at[].set round trips); padded zeros do not change
    # the matmul result.
    w_p = jnp.pad(w, ((0, 0), (0, k_p - K)))
    xp_p = jnp.pad(xp, ((0, k_p - K), (0, n_p - N)))
    b_p = bias.reshape(E, 1).astype(jnp.float32)

    grid = (n_p // tn, k_p // tk)
    out = pl.pallas_call(
        _fused_patch_embed_kernel,
        out_shape=jax.ShapeDtypeStruct((E, n_p), jnp.float32),
        grid_spec=pltpu.PrefetchScalarGridSpec(
            num_scalar_prefetch=0,
            grid=grid,
            in_specs=[
                pl.BlockSpec((E, tk), lambda n, k: (0, k)),   # weights (bf16)
                pl.BlockSpec((tk, tn), lambda n, k: (k, n)),  # patches (bf16)
                pl.BlockSpec((E, 1), lambda n, k: (0, 0)),    # bias (f32)
            ],
            out_specs=pl.BlockSpec((E, tn), lambda n, k: (0, n)),
            scratch_shapes=[pltpu.VMEM((E, tn), jnp.float32)],
        ),
        compiler_params=pltpu.CompilerParams(
            dimension_semantics=("parallel", "arbitrary"),
            vmem_limit_bytes=32 * 1024 * 1024,
        ),
    )(w_p, xp_p, b_p)
    return out[:, :N]


# ------------------- host-side planning (mirrors torch) ------------------- #

def _plan_tokens(importance_w, num_patches, ps, H):
    """Reproduce the module's data-dependent patch-size logic (host side)."""
    iw = np.asarray(importance_w, dtype=np.float32)
    average_weight = iw.mean(axis=0)
    scaling_factor = 12
    scaled_weights = iw ** scaling_factor
    new_patch_sizes = np.minimum(
        ps * average_weight ** scaling_factor / scaled_weights, ps)
    new_patch_sizes = [min([32, 16, 8], key=lambda v: abs(v - float(num)))
                       for num in new_patch_sizes]
    # (the torch code print()s new_patch_sizes; omitted so stdout is only KERNEL_OK)

    tokens = []            # (start_row, start_col, size) in final sequence order
    subpatch_counts = []
    for i in range(num_patches):
        size_i = new_patch_sizes[i]
        ini_col = i * ps % H
        ini_row = i * ps // H * ps
        if size_i < ps and size_i > 7:
            row_subpatches = ps // size_i
            num_subpatches = row_subpatches ** 2
            for j in range(num_subpatches):
                start_col = ini_col + j * size_i % (row_subpatches * size_i)
                start_row = ini_row + j * size_i // (row_subpatches * size_i) * size_i
                tokens.append((start_row, start_col, size_i))
            subpatch_counts.append(num_subpatches)
        else:
            tokens.append((ini_row, ini_col, ps))
            subpatch_counts.append(1)
    return tokens, subpatch_counts


def _effective_weight(weight, ps, s):
    """Exactly torch's .view(E,C,kd,kd,s,s).mean(dim=2).mean(dim=2) semantics."""
    if s == ps:
        return weight
    E, C = weight.shape[0], weight.shape[1]
    kd = ps // s
    return weight.reshape(E, C, kd, kd, s, s).mean(axis=2).mean(axis=2)


# ------------------------------- forward ---------------------------------- #

def patch_embedding_forward(x, importance_w, num_patches, weight, bias, patch_size):
    ps = patch_size
    E, C = weight.shape[0], weight.shape[1]
    B = x.shape[0]
    H = x.shape[3]  # the torch code reads x.shape[3] and calls it H

    tokens, subpatch_counts = _plan_tokens(importance_w, num_patches, ps, H)
    T = len(tokens)

    # Fuse every patch-size group into ONE matmul:
    #   * weights for each distinct size are concatenated along K,
    #   * each token's flattened patch occupies only its group's K segment
    #     (block-diagonal layout), columns are group-contiguous.
    sizes = sorted({s for (_, _, s) in tokens})
    k_total = sum(C * s * s for s in sizes)

    w_blocks, xp_blocks = [], []
    grouped_positions, group_extents = [], []
    k_off = 0
    for s in sizes:
        idxs = [t for t, (_, _, sz) in enumerate(tokens) if sz == s]
        t_g = len(idxs)
        k_g = C * s * s

        # im2col for this size group (host/XLA side; each (sub)patch flattened
        # to (c, h, w) row-major so conv(stride=kernel)+avgpool == matmul).
        # TODO(synk): this gather could move into the kernel's DMA path with
        # scalar-prefetched (row, col) tables and memory_space=pl.ANY.
        patches = jnp.stack([x[:, :, r:r + s, c:c + s]
                             for (r, c, sz) in tokens if sz == s], axis=1)
        xp = patches.reshape(B * t_g, k_g).astype(jnp.float32)       # (B*T_g, K_g)
        xp_blocks.append(jnp.pad(xp.T,                               # (K_total, B*T_g)
                                 ((k_off, k_total - k_off - k_g), (0, 0))))

        w_eff = _effective_weight(weight, ps, s).reshape(E, k_g)
        w_blocks.append(w_eff.astype(jnp.float32))

        grouped_positions.extend(idxs)
        group_extents.append(t_g)
        k_off += k_g

    # bf16 operands (halve HBM/VMEM traffic, 2x MXU rate); f32 accumulation.
    w_cat = jnp.concatenate(w_blocks, axis=1).astype(jnp.bfloat16)    # (E, K)
    xp_cat = jnp.concatenate(xp_blocks, axis=1).astype(jnp.bfloat16)  # (K, N)

    out_en = _fused_embed_matmul(w_cat, xp_cat, bias)                 # (E, N) f32

    # (E, N) -> (B, T, E) in grouped column order, then ONE permutation back
    # to the module's token sequence order.
    embs = out_en.T                                                   # (N, E)
    parts, col = [], 0
    for t_g in group_extents:
        parts.append(embs[col: col + B * t_g].reshape(B, t_g, E))
        col += B * t_g
    out_grouped = parts[0] if len(parts) == 1 else jnp.concatenate(parts, axis=1)
    if grouped_positions != list(range(T)):
        inv = np.argsort(np.asarray(grouped_positions))
        out_grouped = jnp.take(out_grouped, jnp.asarray(inv), axis=1)
    return out_grouped, subpatch_counts


# pure-JAX reference (per-token einsum, f32/HIGHEST) for correctness checking
def _reference(x, importance_w, num_patches, weight, bias, patch_size):
    ps = patch_size
    H = x.shape[3]
    tokens, counts = _plan_tokens(importance_w, num_patches, ps, H)
    rows = []
    for (r, c, s) in tokens:
        patch = x[:, :, r:r + s, c:c + s].astype(jnp.float32)
        w_eff = _effective_weight(weight, ps, s)
        emb = jnp.einsum('bchw,echw->be', patch, w_eff,
                         precision=jax.lax.Precision.HIGHEST) + bias
        rows.append(emb)
    return jnp.stack(rows, axis=1), counts


# --------------------------------- main ------------------------------------ #

if __name__ == "__main__":
    key = jax.random.PRNGKey(0)
    k_x, k_w, k_b = jax.random.split(key, 3)

    in_channels, embed_dim, patch_size = 3, 32, 16
    B, H, W = 2, 32, 32
    num_patches = (H // patch_size) * (W // patch_size)   # 4

    x = jax.random.normal(k_x, (B, in_channels, H, W), dtype=jnp.float32)
    # Fixed importance weights so the plan deterministically exercises BOTH
    # branches: patch 2 is subdivided into four 8x8 sub-patches, the rest stay
    # full 16x16 patches (and the token permutation is non-trivial).
    importance_w = jnp.array([1.0, 1.0, 1.3, 0.9], dtype=jnp.float32)

    # deterministic Conv2d-style parameters (nn.Conv2d(in_ch, embed_dim, ps, ps))
    fan_in = in_channels * patch_size * patch_size
    bound = 1.0 / math.sqrt(fan_in)
    weight = jax.random.uniform(k_w, (embed_dim, in_channels, patch_size, patch_size),
                                dtype=jnp.float32, minval=-bound, maxval=bound)
    bias = jax.random.uniform(k_b, (embed_dim,), dtype=jnp.float32,
                              minval=-bound, maxval=bound)

    out, subpatch_counts = patch_embedding_forward(
        x, importance_w, num_patches, weight, bias, patch_size)
    out = jax.block_until_ready(out)

    ref, ref_counts = _reference(x, importance_w, num_patches, weight, bias, patch_size)
    ref = jax.block_until_ready(ref)

    assert subpatch_counts == ref_counts
    assert out.shape == ref.shape == (B, sum(subpatch_counts), embed_dim)
    # bf16 operands with f32 accumulation -> looser tolerance than pure f32.
    np.testing.assert_allclose(np.asarray(out), np.asarray(ref),
                               rtol=2e-2, atol=2e-2)

    print("KERNEL_OK")
</pallas_src>

<mosaic_0001>
module attributes {stable_mosaic.version = 11 : i64} {
  func.func @_fused_patch_embed_kernel(%arg0: i32, %arg1: i32, %arg2: memref<32x512xbf16, #tpu.memory_space<vmem>>, %arg3: memref<512x128xbf16, #tpu.memory_space<vmem>>, %arg4: memref<32x1xf32, #tpu.memory_space<vmem>>, %arg5: memref<32x128xf32, #tpu.memory_space<vmem>>, %arg6: memref<32x128xf32, #tpu.memory_space<vmem>>) attributes {dimension_semantics = [#tpu.dimension_semantics<parallel>, #tpu.dimension_semantics<arbitrary>], iteration_bounds = array<i64: 1, 2>, scalar_prefetch = 0 : i64, scratch_operands = 1 : i64, tpu.core_type = #tpu.core_type<tc>, window_params = [{transform_indices = @transform_0, window_bounds = array<i64: 32, 512>}, {transform_indices = @transform_1, window_bounds = array<i64: 512, 128>}, {pipeline_mode = #tpu.pipeline_mode<synchronous>, transform_indices = @transform_2, window_bounds = array<i64: 32, 1>}, {transform_indices = @transform_3, window_bounds = array<i64: 32, 128>}]} {
    %c0_i32 = arith.constant 0 : i32
    %0 = arith.cmpi eq, %arg1, %c0_i32 : i32
    %1 = arith.extui %0 : i1 to i32
    %c0_i32_0 = arith.constant 0 : i32
    %2 = arith.cmpi ne, %1, %c0_i32_0 : i32
    scf.if %2 {
      %cst_9 = arith.constant 0.000000e+00 : f32
      %12 = vector.broadcast %cst_9 : f32 to vector<32x128xf32>
      %c0_10 = arith.constant 0 : index
      %c0_11 = arith.constant 0 : index
      %13 = vector.load %arg6[%c0_10, %c0_11] : memref<32x128xf32, #tpu.memory_space<vmem>>, vector<32x128xf32>
      tpu.vector_store %arg6[%c0_10, %c0_11], %12 {strides = array<i32>} : memref<32x128xf32, #tpu.memory_space<vmem>>, vector<32x128xf32>,
    } else {
    }
    %c0 = arith.constant 0 : index
    %c0_1 = arith.constant 0 : index
    %3 = vector.load %arg6[%c0, %c0_1] : memref<32x128xf32, #tpu.memory_space<vmem>>, vector<32x128xf32>
    %c0_2 = arith.constant 0 : index
    %c0_3 = arith.constant 0 : index
    %4 = vector.load %arg2[%c0_2, %c0_3] : memref<32x512xbf16, #tpu.memory_space<vmem>>, vector<32x512xbf16>
    %c0_4 = arith.constant 0 : index
    %c0_5 = arith.constant 0 : index
    %5 = vector.load %arg3[%c0_4, %c0_5] : memref<512x128xbf16, #tpu.memory_space<vmem>>, vector<512x128xbf16>
    %cst = arith.constant dense<0.000000e+00> : vector<32x128xf32>
    %6 = tpu.matmul %4, %5, %cst {dimension_numbers = #tpu.dot_dimension_numbers<[1], [0], [0], [1], [0, 0, 1, 1], [], []>} : vector<32x512xbf16>, vector<512x128xbf16>, vector<32x128xf32> -> vector<32x128xf32>
    %7 = arith.addf %3, %6 : vector<32x128xf32>
    %c0_6 = arith.constant 0 : index
    %c0_7 = arith.constant 0 : index
    %8 = vector.load %arg6[%c0_6, %c0_7] : memref<32x128xf32, #tpu.memory_space<vmem>>, vector<32x128xf32>
    tpu.vector_store %arg6[%c0_6, %c0_7], %7 {strides = array<i32>} : memref<32x128xf32, #tpu.memory_space<vmem>>, vector<32x128xf32>,
    %c1_i32 = arith.constant 1 : i32
    %9 = arith.cmpi eq, %arg1, %c1_i32 : i32
    %10 = arith.extui %9 : i1 to i32
    %c0_i32_8 = arith.constant 0 : i32
    %11 = arith.cmpi ne, %10, %c0_i32_8 : i32
    scf.if %11 {
      %c0_9 = arith.constant 0 : index
      %c0_10 = arith.constant 0 : index
      %12 = vector.load %arg6[%c0_9, %c0_10] : memref<32x128xf32, #tpu.memory_space<vmem>>, vector<32x128xf32>
      %c0_11 = arith.constant 0 : index
      %c0_12 = arith.constant 0 : index
      %13 = vector.load %arg4[%c0_11, %c0_12] : memref<32x1xf32, #tpu.memory_space<vmem>>, vector<32x1xf32>
      %14 = vector.broadcast %13 : vector<32x1xf32> to vector<32x128xf32>
      %15 = arith.addf %12, %14 : vector<32x128xf32>
      %c0_13 = arith.constant 0 : index
      %c0_14 = arith.constant 0 : index
      %16 = vector.load %arg5[%c0_13, %c0_14] : memref<32x128xf32, #tpu.memory_space<vmem>>, vector<32x128xf32>
      tpu.vector_store %arg5[%c0_13, %c0_14], %15 {strides = array<i32>} : memref<32x128xf32, #tpu.memory_space<vmem>>, vector<32x128xf32>,
    } else {
    }
    return
  }
  func.func @transform_0(%arg0: i32, %arg1: i32) -> (i32, i32) {
    %c0_i32 = arith.constant 0 : i32
    %c0_i32_0 = arith.constant 0 : i32
    return %c0_i32, %arg1 : i32, i32
  }
  func.func @transform_1(%arg0: i32, %arg1: i32) -> (i32, i32) {
    %c0_i32 = arith.constant 0 : i32
    return %arg1, %arg0 : i32, i32
  }
  func.func @transform_2(%arg0: i32, %arg1: i32) -> (i32, i32) {
    %c0_i32 = arith.constant 0 : i32
    %c0_i32_0 = arith.constant 0 : i32
    %c0_i32_1 = arith.constant 0 : i32
    return %c0_i32, %c0_i32_0 : i32, i32
  }
  func.func @transform_3(%arg0: i32, %arg1: i32) -> (i32, i32) {
    %c0_i32 = arith.constant 0 : i32
    %c0_i32_0 = arith.constant 0 : i32
    return %c0_i32, %arg0 : i32, i32
  }
}

</mosaic_0001>

<llo_original>
// kernel: tpu_custom_call.1
$region0: #{tpu_custom_call.1}
  #allocation0 [shape = 'u32[]', space=smem, size = 0x4, offset = 0x4, fixed_abs, tag = 'smem constant byte address 0x4 - core index']
  #allocation1 [shape = 'u32[144,128]{1,0:T(1,128)}', space=vmem, size = 0x12000, scoped, tag = 'internal scratch']
  #allocation2 [shape = 'f32[32,128]{1,0:T(8,128)}', space=vmem, size = 0x4000, scoped, tag = 'scratch operand']
  %s0 = inlined_call_operand.hbm [shape: bf16[32,1024], index: 0, kind: input, shape index: {}]
  %s1 = inlined_call_operand.hbm [shape: bf16[1024,128], index: 1, kind: input, shape index: {}]
  %s2 = inlined_call_operand.vmem [shape: f32[32,1], index: 2, kind: input, shape index: {}]
  %s3 = inlined_call_operand.hbm [shape: f32[32,128], index: 3, kind: output, shape index: {}]
  %s4 = sld [smem:[#allocation0]]
  $region61: #{tpu_custom_call.1} parent=0
    _
  %s6 = ssub.s32 1, %s4
  %s7 = scalar_select 0, %s6, %s4
  $region1: #{tpu_custom_call.1} parent=0
    #allocation3 [shape = 'u8[65536]{0}', space=vmem, size = 0x10000, scoped, tag = 'input window, operand 0']
    #allocation4 [shape = 's32[2]{0}', space=sflag, size = 0x8, scoped, tag = 'scoped memory for tpu_custom_call.1']
    #allocation5 [shape = 's32[2]{0}', space=sflag, size = 0x8, scoped, tag = 'scoped memory for tpu_custom_call.1']
    #allocation6 [shape = 'u8[262144]{0}', space=vmem, size = 0x40000, scoped, tag = 'input window, operand 1']
    #allocation7 [shape = 's32[2]{0}', space=sflag, size = 0x8, scoped, tag = 'scoped memory for tpu_custom_call.1']
    #allocation8 [shape = 'u8[16384]{0}', space=vmem, size = 0x4000, scoped, tag = 'output window, operand 0, single buffered']
    %8 = vsyncpa [#allocation4], 0
    %s9 = scalar_lea.sflag [#allocation4], 1
    %10 = vsyncpa %s9, 0
    %11 = vsyncpa [#allocation7], 0
    %s12 = scalar_lea.sflag [#allocation7], 1
    %13 = vsyncpa %s12, 0
    %14 = vsyncpa [#allocation5], 0
    loop: start=0, step=1, limit=4
    $region2: #{tpu_custom_call.1} parent=1 // loop_pre_header
      _
    $region3: #{tpu_custom_call.1} parent=1 // loop_header
      %s16 = sphi 0, %s20
      %p17 = scmp.ge.s32.totalorder %s16, 4
      %s23 = sphi 0, %s35
      %s24 = sphi 0, %s31
      %s25 = sphi 0, %s23
      %s26 = sphi 0, %s24
      %s27 = sphi 0, %s25
      %s28 = sphi 0, %s26
      %s38 = sphi 0, %s40
      %s41 = sphi 0, %s38
      %s42 = sphi 0, %s41
      %s58 = sphi 0, %s42
      %s66 = sphi 0, %s68
      %s69 = sphi 0, %s66
      %s70 = sphi 0, %s69
      %s86 = sphi 0, %s70
      %s90 = sphi 0, %s90
      %s92 = sphi 0, %s90
      %s93 = sphi 0, %s92
      %s107 = sphi 0, %s93
      %s113 = sphi 0, %s115
      %s116 = sphi 0, %s113
      %s117 = sphi 0, %s116
      %s133 = sphi 0, %s117
    $region4: #{tpu_custom_call.1} parent=1 // loop_header_branch
      %19 = sbr.rel (%p17) target = $region8
    $region5: #{tpu_custom_call.1} parent=1 // loop_body
      %s21 = ssub.s32 %s16, 1
      %s22 = ssub.s32 %s16, 2
      %s29 = sadd.s32 1, %s24
      %p30 = scmp.ge.s32.totalorder %s29, 2
      %s31 = scalar_select %p30, 0, %s29
      %s32 = sadd.s32 1, %s23
      %s33 = scalar_select %p30, %s32, %s23
      %p34 = scmp.ge.s32.totalorder %s33, 1
      %s35 = scalar_select %p34, 0, %s33
      %s36 = ssub.s32 %s24, %s31
      %p37 = scmp.eq.s32.totalorder %s36, 0
      %s39 = sadd.s32 %s38, 1
      %s40 = scalar_select %p37, %s38, %s39
      %p43 = pneg %p37
      %p44 = scmp.eq.s32.totalorder %s16, 1
      %p45 = por %p43, %p44
      %p46 = scmp.ne.s32.totalorder %s38, %s41
      %p47 = scmp.eq.s32.totalorder %s16, 0
      %p48 = por %p46, %p47
      %p49 = scmp.ne.s32.totalorder %s38, %s41
      %p50 = scmp.eq.s32.totalorder %s21, 1
      %p51 = por %p49, %p50
      %p52 = scmp.ne.s32.totalorder %s41, %s42
      %p53 = scmp.eq.s32.totalorder %s21, 0
      %p54 = por %p52, %p53
      %p55 = scmp.ne.s32.totalorder %s41, %s42
      %p56 = scmp.eq.s32.totalorder %s22, 1
      %p57 = por %p55, %p56
      %p59 = scmp.ne.s32.totalorder %s42, %s58
      %p60 = scmp.eq.s32.totalorder %s22, 0
      %p61 = por %p59, %p60
      %s62 = ssub.s32 %s24, %s31
      %s63 = ssub.s32 %s23, %s35
      %s64 = sor.u32 %s62, %s63
      %p65 = scmp.eq.s32.totalorder %s64, 0
      %s67 = sadd.s32 %s66, 1
      %s68 = scalar_select %p65, %s66, %s67
      %p71 = pneg %p65
      %p72 = scmp.eq.s32.totalorder %s16, 1
      %p73 = por %p71, %p72
      %p74 = scmp.ne.s32.totalorder %s66, %s69
      %p75 = scmp.eq.s32.totalorder %s16, 0
      %p76 = por %p74, %p75
      %p77 = scmp.ne.s32.totalorder %s66, %s69
      %p78 = scmp.eq.s32.totalorder %s21, 1
      %p79 = por %p77, %p78
      %p80 = scmp.ne.s32.totalorder %s69, %s70
      %p81 = scmp.eq.s32.totalorder %s21, 0
      %p82 = por %p80, %p81
      %p83 = scmp.ne.s32.totalorder %s69, %s70
      %p84 = scmp.eq.s32.totalorder %s22, 1
      %p85 = por %p83, %p84
      %p87 = scmp.ne.s32.totalorder %s70, %s86
      %p88 = scmp.eq.s32.totalorder %s22, 0
      %p89 = por %p87, %p88
      %s91 = sadd.s32 %s90, 1
      %p94 = scmp.eq.s32.totalorder %s16, 1
      %p95 = scmp.ne.s32.totalorder %s90, %s92
      %p96 = scmp.eq.s32.totalorder %s16, 0
      %p97 = por %p95, %p96
      %p98 = scmp.ne.s32.totalorder %s90, %s92
      %p99 = scmp.eq.s32.totalorder %s21, 1
      %p100 = por %p98, %p99
      %p101 = scmp.ne.s32.totalorder %s92, %s93
      %p102 = scmp.eq.s32.totalorder %s21, 0
      %p103 = por %p101, %p102
      %p104 = scmp.ne.s32.totalorder %s92, %s93
      %p105 = scmp.eq.s32.totalorder %s22, 1
      %p106 = por %p104, %p105
      %p108 = scmp.ne.s32.totalorder %s93, %s107
      %p109 = scmp.eq.s32.totalorder %s22, 0
      %p110 = por %p108, %p109
      %s111 = ssub.s32 %s23, %s35
      %p112 = scmp.eq.s32.totalorder %s111, 0
      %s114 = sadd.s32 %s113, 1
      %s115 = scalar_select %p112, %s113, %s114
      %p118 = pneg %p112
      %p119 = scmp.eq.s32.totalorder %s16, 1
      %p120 = por %p118, %p119
      %p121 = scmp.ne.s32.totalorder %s113, %s116
      %p122 = scmp.eq.s32.totalorder %s16, 0
      %p123 = por %p121, %p122
      %p124 = scmp.ne.s32.totalorder %s113, %s116
      %p125 = scmp.eq.s32.totalorder %s21, 1
      %p126 = por %p124, %p125
      %p127 = scmp.ne.s32.totalorder %s116, %s117
      %p128 = scmp.eq.s32.totalorder %s21, 0
      %p129 = por %p127, %p128
      %p130 = scmp.ne.s32.totalorder %s116, %s117
      %p131 = scmp.eq.s32.totalorder %s22, 1
      %p132 = por %p130, %p131
      %p134 = scmp.ne.s32.totalorder %s117, %s133
      %p135 = scmp.eq.s32.totalorder %s22, 0
      %p136 = por %p134, %p135
      %p137 = scmp.le.s32.totalorder 1, %s16
      %p138 = scmp.lt.s32.totalorder %s16, 3
      %p139 = pnand %p137, %p138
      %p140 = pneg %p139
      // Predicated region
      $region9: #{tpu_custom_call.1} parent=5 // pred_check
        _
      $region10: #{tpu_custom_call.1} parent=5 // pred_check_branch
        %142 = sbr.rel (%p139) target = $region12
      $region11: #{tpu_custom_call.1} parent=5 // pred_region
        %s143 = ssub.s32 %s16, 1
        // Predicated region
        $region13: #{tpu_custom_call.1} parent=11 // pred_check
          %p144 = pneg %p103
        $region14: #{tpu_custom_call.1} parent=11 // pred_check_branch
          %146 = sbr.rel (%p144) target = $region16
        $region15: #{tpu_custom_call.1} parent=11 // pred_region
          _
        $region16: #{tpu_custom_call.1} parent=11 // pred_fallthru
          _
      $region12: #{tpu_custom_call.1} parent=5 // pred_fallthru
        _
      %p147 = scmp.lt.s32.totalorder %s16, 2
      // Predicated region
      $region17: #{tpu_custom_call.1} parent=5 // pred_check
        %p148 = pneg %p147
      $region18: #{tpu_custom_call.1} parent=5 // pred_check_branch
        %150 = sbr.rel (%p148) target = $region20
      $region19: #{tpu_custom_call.1} parent=5 // pred_region
        // Predicated region
        $region21: #{tpu_custom_call.1} parent=19 // pred_check
          %p151 = pneg %p48
        $region22: #{tpu_custom_call.1} parent=19 // pred_check_branch
          %153 = sbr.rel (%p151) target = $region24
        $region23: #{tpu_custom_call.1} parent=19 // pred_region
          %s154 = sand.u32 %s38, 1
          %s155 = scalar_lea.sflag [#allocation4], %s154
          %s156 = sand.u32 %s38, 1
          %s157 = smul.addr %s156, 64
          %s158 = scalar_lea.vmem [#allocation3], %s157
          %s159 = smul.u32 4, %s24
          %s161 = ssub.s32 1024, 1024
          %162 = vsyncadd %s155, %s161
          %s163 = smul.addr %s159, 64
          %s164 = scalar_lea.hbm %s0, %s163
          %s165 = sshll.u32 %s158, 4
          %s166 = int_to_ptr.vmem [resolvable:$true] %s165
          %171 = dma.hbm_to_vmem [thread:$0]  %s164, 1024, %s166, %s155, 512, 256, 16
        $region24: #{tpu_custom_call.1} parent=19 // pred_fallthru
          _
        // Predicated region
        $region25: #{tpu_custom_call.1} parent=19 // pred_check
          %p172 = pneg %p76
        $region26: #{tpu_custom_call.1} parent=19 // pred_check_branch
          %174 = sbr.rel (%p172) target = $region28
        $region27: #{tpu_custom_call.1} parent=19 // pred_region
          %s175 = sand.u32 %s66, 1
          %s176 = scalar_lea.sflag [#allocation7], %s175
          %s177 = sand.u32 %s66, 1
          %s178 = smul.addr %s177, 256
          %s179 = scalar_lea.vmem [#allocation6], %s178
          %s180 = smul.u32 64, %s24
          %s182 = ssub.s32 4096, 4096
          %183 = vsyncadd %s176, %s182
          %s184 = sadd.s32 %s23, %s180
          %s185 = smul.addr %s184, 64
          %s186 = scalar_lea.hbm %s1, %s185
          %s187 = sshll.u32 %s179, 4
          %s188 = int_to_ptr.vmem [resolvable:$true] %s187
          %193 = dma.hbm_to_vmem [thread:$0]  %s186, 4096, %s188, %s176, 64, 64, 4
        $region28: #{tpu_custom_call.1} parent=19 // pred_fallthru
          _
      $region20: #{tpu_custom_call.1} parent=5 // pred_fallthru
        _
      %p194 = scmp.le.s32.totalorder 1, %s16
      %p195 = scmp.lt.s32.totalorder %s16, 3
      %p196 = pnand %p194, %p195
      %p197 = pneg %p196
      // Predicated region
      $region29: #{tpu_custom_call.1} parent=5 // pred_check
        _
      $region30: #{tpu_custom_call.1} parent=5 // pred_check_branch
        %199 = sbr.rel (%p196) target = $region32
      $region31: #{tpu_custom_call.1} parent=5 // pred_region
        %s200 = ssub.s32 %s16, 1
        %s201 = sand.u32 %s41, 1
        %s202 = scalar_lea.sflag [#allocation4], %s201
        %s203 = sand.u32 %s41, 1
        %s204 = smul.addr %s203, 64
        %s205 = scalar_lea.vmem [#allocation3], %s204
        // Predicated region
        $region33: #{tpu_custom_call.1} parent=31 // pred_check
          %p206 = pneg %p54
        $region34: #{tpu_custom_call.1} parent=31 // pred_check_branch
          %208 = sbr.rel (%p206) target = $region36
        $region35: #{tpu_custom_call.1} parent=31 // pred_region
          %209 = dma.done %s202, 1024
        $region36: #{tpu_custom_call.1} parent=31 // pred_fallthru
          _
        %s210 = sand.u32 %s69, 1
        %s211 = scalar_lea.sflag [#allocation7], %s210
        %s212 = sand.u32 %s69, 1
        %s213 = smul.addr %s212, 256
        %s214 = scalar_lea.vmem [#allocation6], %s213
        // Predicated region
        $region37: #{tpu_custom_call.1} parent=31 // pred_check
          %p215 = pneg %p82
        $region38: #{tpu_custom_call.1} parent=31 // pred_check_branch
          %217 = sbr.rel (%p215) target = $region40
        $region39: #{tpu_custom_call.1} parent=31 // pred_region
          %218 = dma.done %s211, 4096
        $region40: #{tpu_custom_call.1} parent=31 // pred_fallthru
          _
        %s219 = sand.u32 %s41, 1
        %s220 = scalar_lea.sflag [#allocation4], %s219
        %s221 = sand.u32 %s41, 1
        %s222 = smul.addr %s221, 64
        %s223 = scalar_lea.vmem [#allocation3], %s222
        %p224 = pneg %p54
        %p225 = pneg %p51
        %s226 = sand.u32 %s69, 1
        %s227 = scalar_lea.sflag [#allocation7], %s226
        %s228 = sand.u32 %s69, 1
        %s229 = smul.addr %s228, 256
        %s230 = scalar_lea.vmem [#allocation6], %s229
        %p231 = pneg %p82
        %p232 = pneg %p79
        %p233 = pneg %p103
        %p234 = pneg %p100
        %p235 = pneg %p129
        %p236 = pneg %p126
        %s237 = smul.u32 4, %s26
        %s238 = smul.u32 64, %s26
        %p240 = scmp.eq.s32.totalorder %s26, 0
        // Predicated region
        $region41: #{tpu_custom_call.1} parent=31 // pred_check
          %p241 = pneg %p240
        $region42: #{tpu_custom_call.1} parent=31 // pred_check_branch
          %243 = sbr.rel (%p241) target = $region44
        $region43: #{tpu_custom_call.1} parent=31 // pred_region
          %244 = vst [vmem:[#allocation2] sm:$0xff] 0.0
          %245 = vst [vmem:[#allocation2 + $0x8] sm:$0xff] 0.0
          %246 = vst [vmem:[#allocation2 + $0x10] sm:$0xff] 0.0
          %247 = vst [vmem:[#allocation2 + $0x18] sm:$0xff] 0.0
        $region44: #{tpu_custom_call.1} parent=31 // pred_fallthru
          _
        %v248 = vld [vmem:[#allocation2] sm:$0xff]
        %v249 = vld [vmem:[#allocation2 + $0x8] sm:$0xff]
        %v250 = vld [vmem:[#allocation2 + $0x10] sm:$0xff]
        %v251 = vld [vmem:[#allocation2 + $0x18] sm:$0xff]
        %v252 = vld [vmem:[%s205] sm:$0xff]
        %v253 = vld [vmem:[%s205 + $0x8] sm:$0xff]
        %v254 = vld [vmem:[%s205 + $0x10] sm:$0xff]
        %v255 = vld [vmem:[%s205 + $0x18] sm:$0xff]
        %v256 = vld [vmem:[%s205 + $0x20] sm:$0xff]
        %v257 = vld [vmem:[%s205 + $0x28] sm:$0xff]
        %v258 = vld [vmem:[%s205 + $0x30] sm:$0xff]
        %v259 = vld [vmem:[%s205 + $0x38] sm:$0xff]
        %v260 = vld [vmem:[%s214] sm:$0xf]
        %v261 = vld [vmem:[%s214 + $0x4] sm:$0xf]
        %v262 = vld [vmem:[%s214 + $0x8] sm:$0xf]
        %v263 = vld [vmem:[%s214 + $0xc] sm:$0xf]
        %v264 = vld [vmem:[%s214 + $0x10] sm:$0xf]
        %v265 = vld [vmem:[%s214 + $0x14] sm:$0xf]
        %v266 = vld [vmem:[%s214 + $0x18] sm:$0xf]
        %v267 = vld [vmem:[%s214 + $0x1c] sm:$0xf]
        %v268 = vld [vmem:[%s214 + $0x20] sm:$0xf]
        %v269 = vld [vmem:[%s214 + $0x24] sm:$0xf]
        %v270 = vld [vmem:[%s214 + $0x28] sm:$0xf]
        %v271 = vld [vmem:[%s214 + $0x2c] sm:$0xf]
        %v272 = vld [vmem:[%s214 + $0x30] sm:$0xf]
        %v273 = vld [vmem:[%s214 + $0x34] sm:$0xf]
        %v274 = vld [vmem:[%s214 + $0x38] sm:$0xf]
        %v275 = vld [vmem:[%s214 + $0x3c] sm:$0xf]
        %v276 = vld [vmem:[%s214 + $0x40] sm:$0xf]
        %v277 = vld [vmem:[%s214 + $0x44] sm:$0xf]
        %v278 = vld [vmem:[%s214 + $0x48] sm:$0xf]
        %v279 = vld [vmem:[%s214 + $0x4c] sm:$0xf]
        %v280 = vld [vmem:[%s214 + $0x50] sm:$0xf]
        %v281 = vld [vmem:[%s214 + $0x54] sm:$0xf]
        %v282 = vld [vmem:[%s214 + $0x58] sm:$0xf]
        %v283 = vld [vmem:[%s214 + $0x5c] sm:$0xf]
        %v284 = vld [vmem:[%s214 + $0x60] sm:$0xf]
        %v285 = vld [vmem:[%s214 + $0x64] sm:$0xf]
        %v286 = vld [vmem:[%s214 + $0x68] sm:$0xf]
        %v287 = vld [vmem:[%s214 + $0x6c] sm:$0xf]
        %v288 = vld [vmem:[%s214 + $0x70] sm:$0xf]
        %v289 = vld [vmem:[%s214 + $0x74] sm:$0xf]
        %v290 = vld [vmem:[%s214 + $0x78] sm:$0xf]
        %v291 = vld [vmem:[%s214 + $0x7c] sm:$0xf]
        %v292 = vld [vmem:[%s214 + $0x80] sm:$0xf]
        %v293 = vld [vmem:[%s214 + $0x84] sm:$0xf]
        %v294 = vld [vmem:[%s214 + $0x88] sm:$0xf]
        %v295 = vld [vmem:[%s214 + $0x8c] sm:$0xf]
        %v296 = vld [vmem:[%s214 + $0x90] sm:$0xf]
        %v297 = vld [vmem:[%s214 + $0x94] sm:$0xf]
        %v298 = vld [vmem:[%s214 + $0x98] sm:$0xf]
        %v299 = vld [vmem:[%s214 + $0x9c] sm:$0xf]
        %v300 = vld [vmem:[%s214 + $0xa0] sm:$0xf]
        %v301 = vld [vmem:[%s214 + $0xa4] sm:$0xf]
        %v302 = vld [vmem:[%s214 + $0xa8] sm:$0xf]
        %v303 = vld [vmem:[%s214 + $0xac] sm:$0xf]
        %v304 = vld [vmem:[%s214 + $0xb0] sm:$0xf]
        %v305 = vld [vmem:[%s214 + $0xb4] sm:$0xf]
        %v306 = vld [vmem:[%s214 + $0xb8] sm:$0xf]
        %v307 = vld [vmem:[%s214 + $0xbc] sm:$0xf]
        %v308 = vld [vmem:[%s214 + $0xc0] sm:$0xf]
        %v309 = vld [vmem:[%s214 + $0xc4] sm:$0xf]
        %v310 = vld [vmem:[%s214 + $0xc8] sm:$0xf]
        %v311 = vld [vmem:[%s214 + $0xcc] sm:$0xf]
        %v312 = vld [vmem:[%s214 + $0xd0] sm:$0xf]
        %v313 = vld [vmem:[%s214 + $0xd4] sm:$0xf]
        %v314 = vld [vmem:[%s214 + $0xd8] sm:$0xf]
        %v315 = vld [vmem:[%s214 + $0xdc] sm:$0xf]
        %v316 = vld [vmem:[%s214 + $0xe0] sm:$0xf]
        %v317 = vld [vmem:[%s214 + $0xe4] sm:$0xf]
        %v318 = vld [vmem:[%s214 + $0xe8] sm:$0xf]
        %v319 = vld [vmem:[%s214 + $0xec] sm:$0xf]
        %v320 = vld [vmem:[%s214 + $0xf0] sm:$0xf]
        %v321 = vld [vmem:[%s214 + $0xf4] sm:$0xf]
        %v322 = vld [vmem:[%s214 + $0xf8] sm:$0xf]
        %v323 = vld [vmem:[%s214 + $0xfc] sm:$0xf]
        %v332 = vunpack.c.l.b16 %v252
        %v333 = vunpack.c.h.b16 %v252
        %v334 = vunpack.c.l.b16 %v253
        %v335 = vunpack.c.h.b16 %v253
        %v336 = vunpack.c.l.b16 %v254
        %v337 = vunpack.c.h.b16 %v254
        %v338 = vunpack.c.l.b16 %v255
        %v339 = vunpack.c.h.b16 %v255
        %v340 = vunpack.c.l.b16 %v256
        %v341 = vunpack.c.h.b16 %v256
        %v342 = vunpack.c.l.b16 %v257
        %v343 = vunpack.c.h.b16 %v257
        %v344 = vunpack.c.l.b16 %v258
        %v345 = vunpack.c.h.b16 %v258
        %v346 = vunpack.c.l.b16 %v259
        %v347 = vunpack.c.h.b16 %v259
        %v348 = vpack.c.b16 %v336, %v332
        %v349 = vpack.c.b16 %v337, %v333
        %v350 = vpack.c.b16 %v338, %v334
        %v351 = vpack.c.b16 %v339, %v335
        %v352 = vpack.c.b16 %v344, %v340
        %v353 = vpack.c.b16 %v345, %v341
        %v354 = vpack.c.b16 %v346, %v342
        %v355 = vpack.c.b16 %v347, %v343
        %v428 = vunpack.c.l.b16 %v260
        %v429 = vunpack.c.l.b16 %v261
        %v430 = vunpack.c.l.b16 %v262
        %v431 = vunpack.c.l.b16 %v263
        %v432 = vunpack.c.l.b16 %v264
        %v433 = vunpack.c.l.b16 %v265
        %v434 = vunpack.c.l.b16 %v266
        %v435 = vunpack.c.l.b16 %v267
        %v436 = vunpack.c.l.b16 %v268
        %v437 = vunpack.c.l.b16 %v269
        %v438 = vunpack.c.l.b16 %v270
        %v439 = vunpack.c.l.b16 %v271
        %v440 = vunpack.c.l.b16 %v272
        %v441 = vunpack.c.l.b16 %v273
        %v442 = vunpack.c.l.b16 %v274
        %v443 = vunpack.c.l.b16 %v275
        %v444 = vunpack.c.l.b16 %v276
        %v445 = vunpack.c.l.b16 %v277
        %v446 = vunpack.c.l.b16 %v278
        %v447 = vunpack.c.l.b16 %v279
        %v448 = vunpack.c.l.b16 %v280
        %v449 = vunpack.c.l.b16 %v281
        %v450 = vunpack.c.l.b16 %v282
        %v451 = vunpack.c.l.b16 %v283
        %v452 = vunpack.c.l.b16 %v284
        %v453 = vunpack.c.l.b16 %v285
        %v454 = vunpack.c.l.b16 %v286
        %v455 = vunpack.c.l.b16 %v287
        %v456 = vunpack.c.l.b16 %v288
        %v457 = vunpack.c.l.b16 %v289
        %v458 = vunpack.c.l.b16 %v290
        %v459 = vunpack.c.l.b16 %v291
        %v460 = vunpack.c.l.b16 %v292
        %v461 = vunpack.c.l.b16 %v293
        %v462 = vunpack.c.l.b16 %v294
        %v463 = vunpack.c.l.b16 %v295
        %v464 = vunpack.c.l.b16 %v296
        %v465 = vunpack.c.l.b16 %v297
        %v466 = vunpack.c.l.b16 %v298
        %v467 = vunpack.c.l.b16 %v299
        %v468 = vunpack.c.l.b16 %v300
        %v469 = vunpack.c.l.b16 %v301
        %v470 = vunpack.c.l.b16 %v302
        %v471 = vunpack.c.l.b16 %v303
        %v472 = vunpack.c.l.b16 %v304
        %v473 = vunpack.c.l.b16 %v305
        %v474 = vunpack.c.l.b16 %v306
        %v475 = vunpack.c.l.b16 %v307
        %v476 = vunpack.c.l.b16 %v308
        %v477 = vunpack.c.l.b16 %v309
        %v478 = vunpack.c.l.b16 %v310
        %v479 = vunpack.c.l.b16 %v311
        %v480 = vunpack.c.l.b16 %v312
        %v481 = vunpack.c.l.b16 %v313
        %v482 = vunpack.c.l.b16 %v314
        %v483 = vunpack.c.l.b16 %v315
        %v484 = vunpack.c.l.b16 %v316
        %v485 = vunpack.c.l.b16 %v317
        %v486 = vunpack.c.l.b16 %v318
        %v487 = vunpack.c.l.b16 %v319
        %v488 = vunpack.c.l.b16 %v320
        %v489 = vunpack.c.l.b16 %v321
        %v490 = vunpack.c.l.b16 %v322
        %v491 = vunpack.c.l.b16 %v323
        %v492 = vpack.c.b16 %v429, %v428
        %v493 = vpack.c.b16 %v431, %v430
        %v494 = vpack.c.b16 %v433, %v432
        %v495 = vpack.c.b16 %v435, %v434
        %v496 = vpack.c.b16 %v437, %v436
        %v497 = vpack.c.b16 %v439, %v438
        %v498 = vpack.c.b16 %v441, %v440
        %v499 = vpack.c.b16 %v443, %v442
        %v500 = vpack.c.b16 %v445, %v444
        %v501 = vpack.c.b16 %v447, %v446
        %v502 = vpack.c.b16 %v449, %v448
        %v503 = vpack.c.b16 %v451, %v450
        %v504 = vpack.c.b16 %v453, %v452
        %v505 = vpack.c.b16 %v455, %v454
        %v506 = vpack.c.b16 %v457, %v456
        %v507 = vpack.c.b16 %v459, %v458
        %v508 = vpack.c.b16 %v461, %v460
        %v509 = vpack.c.b16 %v463, %v462
        %v510 = vpack.c.b16 %v465, %v464
        %v511 = vpack.c.b16 %v467, %v466
        %v512 = vpack.c.b16 %v469, %v468
        %v513 = vpack.c.b16 %v471, %v470
        %v514 = vpack.c.b16 %v473, %v472
        %v515 = vpack.c.b16 %v475, %v474
        %v516 = vpack.c.b16 %v477, %v476
        %v517 = vpack.c.b16 %v479, %v478
        %v518 = vpack.c.b16 %v481, %v480
        %v519 = vpack.c.b16 %v483, %v482
        %v520 = vpack.c.b16 %v485, %v484
        %v521 = vpack.c.b16 %v487, %v486
        %v522 = vpack.c.b16 %v489, %v488
        %v523 = vpack.c.b16 %v491, %v490
        %556 = vmatprep.subr.bf16.mxu0 0
        %557 = vmatpush1.bf16.msra.mxu0 %v499
        %558 = vmatprep.subr.bf16.mxu0 0
        %559 = vmatpush1.bf16.msra.mxu0 %v498
        %560 = vmatprep.subr.bf16.mxu0 0
        %561 = vmatpush1.bf16.msra.mxu0 %v497
        %562 = vmatprep.subr.bf16.mxu0 0
        %563 = vmatpush1.bf16.msra.mxu0 %v496
        %564 = vmatprep.subr.bf16.mxu0 0
        %565 = vmatpush1.bf16.msra.mxu0 %v495
        %566 = vmatprep.subr.bf16.mxu0 0
        %567 = vmatpush1.bf16.msra.mxu0 %v494
        %568 = vmatprep.subr.bf16.mxu0 0
        %569 = vmatpush1.bf16.msra.mxu0 %v493
        %570 = vmatprep.subr.bf16.mxu0 0
        %571 = vmatpush1.bf16.msra.mxu0 %v492
        %572 = vmatprep.subr.bf16.mxu0 0
        %573 = vmatpush2.bf16.msra.mxu0 %v507
        %574 = vmatprep.subr.bf16.mxu0 0
        %575 = vmatpush2.bf16.msra.mxu0 %v506
        %576 = vmatprep.subr.bf16.mxu0 0
        %577 = vmatpush2.bf16.msra.mxu0 %v505
        %578 = vmatprep.subr.bf16.mxu0 0
        %579 = vmatpush2.bf16.msra.mxu0 %v504
        %580 = vmatprep.subr.bf16.mxu0 0
        %581 = vmatpush2.bf16.msra.mxu0 %v503
        %582 = vmatprep.subr.bf16.mxu0 0
        %583 = vmatpush2.bf16.msra.mxu0 %v502
        %584 = vmatprep.subr.bf16.mxu0 0
        %585 = vmatpush2.bf16.msra.mxu0 %v501
        %586 = vmatprep.subr.bf16.mxu0 0
        %587 = vmatpush2.bf16.msra.mxu0 %v500
        %588 = vmatprep.mubr.bf16.mxu0 %v349
        %589 = vmatmul.mubr.bf16.gmra.mxu0 %v348
        %v590 = vpop.f32.mrf.mxu0
        %v591 = vadd.f32 0.0, %v590
        %v592 = vpop.f32.mrf.mxu0
        %v593 = vpop.f32.mrf.mxu0
        %v594 = vadd.f32 0.0, %v593
        %v595 = vpop.f32.mrf.mxu0
        %596 = vmatprep.mubr.bf16.mxu0 %v353
        %597 = vmatmul.mubr.bf16.gmra.mxu0 %v352
        %v598 = vpop.f32.mrf.mxu0
        %v599 = vadd.f32 0.0, %v598
        %v600 = vpop.f32.mrf.mxu0
        %v601 = vpop.f32.mrf.mxu0
        %v602 = vadd.f32 0.0, %v601
        %v603 = vpop.f32.mrf.mxu0
        %604 = vdwg.mxu0
        %605 = vmatprep.subr.bf16.mxu0 0
        %606 = vmatpush1.bf16.msra.mxu0 %v515
        %607 = vmatprep.subr.bf16.mxu0 0
        %608 = vmatpush1.bf16.msra.mxu0 %v514
        %609 = vmatprep.subr.bf16.mxu0 0
        %610 = vmatpush1.bf16.msra.mxu0 %v513
        %611 = vmatprep.subr.bf16.mxu0 0
        %612 = vmatpush1.bf16.msra.mxu0 %v512
        %613 = vmatprep.subr.bf16.mxu0 0
        %614 = vmatpush1.bf16.msra.mxu0 %v511
        %615 = vmatprep.subr.bf16.mxu0 0
        %616 = vmatpush1.bf16.msra.mxu0 %v510
        %617 = vmatprep.subr.bf16.mxu0 0
        %618 = vmatpush1.bf16.msra.mxu0 %v509
        %619 = vmatprep.subr.bf16.mxu0 0
        %620 = vmatpush1.bf16.msra.mxu0 %v508
        %621 = vmatprep.subr.bf16.mxu0 0
        %622 = vmatpush2.bf16.msra.mxu0 %v523
        %623 = vmatprep.subr.bf16.mxu0 0
        %624 = vmatpush2.bf16.msra.mxu0 %v522
        %625 = vmatprep.subr.bf16.mxu0 0
        %626 = vmatpush2.bf16.msra.mxu0 %v521
        %627 = vmatprep.subr.bf16.mxu0 0
        %628 = vmatpush2.bf16.msra.mxu0 %v520
        %629 = vmatprep.subr.bf16.mxu0 0
        %630 = vmatpush2.bf16.msra.mxu0 %v519
        %631 = vmatprep.subr.bf16.mxu0 0
        %632 = vmatpush2.bf16.msra.mxu0 %v518
        %633 = vmatprep.subr.bf16.mxu0 0
        %634 = vmatpush2.bf16.msra.mxu0 %v517
        %635 = vmatprep.subr.bf16.mxu0 0
        %636 = vmatpush2.bf16.msra.mxu0 %v516
        %637 = vmatprep.mubr.bf16.mxu0 %v351
        %638 = vmatmul.mubr.bf16.gmra.mxu0 %v350
        %v639 = vpop.f32.mrf.mxu0
        %v640 = vadd.f32 %v591, %v639
        %v641 = vpop.f32.mrf.mxu0
        %v642 = vpop.f32.mrf.mxu0
        %v643 = vadd.f32 %v594, %v642
        %v644 = vpop.f32.mrf.mxu0
        %645 = vmatprep.mubr.bf16.mxu0 %v355
        %646 = vmatmul.mubr.bf16.gmra.mxu0 %v354
        %v647 = vpop.f32.mrf.mxu0
        %v648 = vadd.f32 %v599, %v647
        %v649 = vpop.f32.mrf.mxu0
        %v650 = vpop.f32.mrf.mxu0
        %v651 = vadd.f32 %v602, %v650
        %v652 = vpop.f32.mrf.mxu0
        %653 = vdwg.mxu0
        %v654 = vadd.f32 %v248, %v640
        %v655 = vadd.f32 %v249, %v643
        %v656 = vadd.f32 %v250, %v648
        %v657 = vadd.f32 %v251, %v651
        %658 = vst [vmem:[#allocation2] sm:$0xff] %v654
        %659 = vst [vmem:[#allocation2 + $0x8] sm:$0xff] %v655
        %660 = vst [vmem:[#allocation2 + $0x10] sm:$0xff] %v656
        %661 = vst [vmem:[#allocation2 + $0x18] sm:$0xff] %v657
        %p662 = scmp.eq.s32.totalorder %s26, 1
        // Predicated region
        $region45: #{tpu_custom_call.1} parent=31 // pred_check
          %p663 = pneg %p662
        $region46: #{tpu_custom_call.1} parent=31 // pred_check_branch
          %665 = sbr.rel (%p663) target = $region48
        $region47: #{tpu_custom_call.1} parent=31 // pred_region
          %v666 = vld [vmem:[#allocation2] sm:$0xff]
          %v667 = vld [vmem:[#allocation2 + $0x8] sm:$0xff]
          %v668 = vld [vmem:[#allocation2 + $0x10] sm:$0xff]
          %v669 = vld [vmem:[#allocation2 + $0x18] sm:$0xff]
          %v670 = vld [vmem:[%s2] sm:$0xff]
          %v671 = vld [vmem:[%s2 + $0x8] sm:$0xff]
          %v672 = vld [vmem:[%s2 + $0x10] sm:$0xff]
          %v673 = vld [vmem:[%s2 + $0x18] sm:$0xff]
          %675 = vset.pattern.permute.xlu0 0
          %676 = vperm.xlu0 %675, %v670
          %v677 = vpop.permute.xlu0 %676
          %680 = vset.pattern.permute.xlu0 0
          %681 = vperm.xlu0 %680, %v671
          %v682 = vpop.permute.xlu0 %681
          %685 = vset.pattern.permute.xlu0 0
          %686 = vperm.xlu0 %685, %v672
          %v687 = vpop.permute.xlu0 %686
          %690 = vset.pattern.permute.xlu0 0
          %691 = vperm.xlu0 %690, %v673
          %v692 = vpop.permute.xlu0 %691
          %v694 = vadd.f32 %v666, %v677
          %v695 = vadd.f32 %v667, %v682
          %v696 = vadd.f32 %v668, %v687
          %v697 = vadd.f32 %v669, %v692
          %698 = vst [vmem:[#allocation8] sm:$0xff] %v694
          %699 = vst [vmem:[#allocation8 + $0x8] sm:$0xff] %v695
          %700 = vst [vmem:[#allocation8 + $0x10] sm:$0xff] %v696
          %701 = vst [vmem:[#allocation8 + $0x18] sm:$0xff] %v697
        $region48: #{tpu_custom_call.1} parent=31 // pred_fallthru
          _
        // Predicated region
        $region49: #{tpu_custom_call.1} parent=31 // pred_check
          %p702 = pneg %p126
        $region50: #{tpu_custom_call.1} parent=31 // pred_check_branch
          %704 = sbr.rel (%p702) target = $region52
        $region51: #{tpu_custom_call.1} parent=31 // pred_region
          %s706 = ssub.s32 512, 512
          %707 = vsyncadd [#allocation5], %s706
          %s708 = smul.addr %s25, 128
          %s709 = scalar_lea.hbm %s3, %s708
          %s710 = sshll.u32 [#allocation8], 4
          %s711 = int_to_ptr.vmem [resolvable:$true] %s710
          %716 = dma.vmem_to_hbm [thread:$0]  %s711, 512, %s709, [#allocation5], 128, 128, 8
        $region52: #{tpu_custom_call.1} parent=31 // pred_fallthru
          _
        // Predicated region
        $region53: #{tpu_custom_call.1} parent=31 // pred_check
          %p717 = pneg %p126
        $region54: #{tpu_custom_call.1} parent=31 // pred_check_branch
          %719 = sbr.rel (%p717) target = $region56
        $region55: #{tpu_custom_call.1} parent=31 // pred_region
          %720 = dma.done [#allocation5], 512
        $region56: #{tpu_custom_call.1} parent=31 // pred_fallthru
          _
      $region32: #{tpu_custom_call.1} parent=5 // pred_fallthru
        _
      %p721 = scmp.le.s32.totalorder 2, %s16
      // Predicated region
      $region57: #{tpu_custom_call.1} parent=5 // pred_check
        %p722 = pneg %p721
      $region58: #{tpu_custom_call.1} parent=5 // pred_check_branch
        %724 = sbr.rel (%p722) target = $region60
      $region59: #{tpu_custom_call.1} parent=5 // pred_region
        %s725 = ssub.s32 %s16, 2
      $region60: #{tpu_custom_call.1} parent=5 // pred_fallthru
        _
    $region6: #{tpu_custom_call.1} parent=1 // loop_footer
      %s20 = sadd.s32 1, %s16
    $region7: #{tpu_custom_call.1} parent=1 // loop_footer_branch
      %15 = sbr.rel target = $region3
    $region8: #{tpu_custom_call.1} parent=1 // loop_exit
      _
    %726 = vsyncpa [#allocation4], 1
    %s727 = scalar_lea.sflag [#allocation4], 1
    %728 = vsyncpa %s727, 1
    %729 = vsyncpa [#allocation7], 1
    %s730 = scalar_lea.sflag [#allocation7], 1
    %731 = vsyncpa %s730, 1
    %732 = vsyncpa [#allocation5], 1
    %s733 = scalar_lea.sflag [#allocation5], 1
    %734 = vsyncpa %s733, 1

</llo_original>
